<compile_context>
chip_gen: v5e
topology: v5e:2x2
jax: 0.10.0
libtpu: 0.0.40
codegen_flags: <defaults>
</compile_context>

<pallas_src>
import functools

import jax
import jax.numpy as jnp
from jax import lax
from jax.experimental import pallas as pl
from jax.experimental.pallas import tpu as pltpu

_LANE = 128
_MIB = 1024 * 1024


# ----------------------------------------------------------------------------- hw sizing
def _vmem_capacity_bytes():
    # Trace-time hardware query; fall back to the smallest generation (v7x,
    # 64 MiB per TensorCore) if the query is unavailable.
    try:
        return int(pltpu.get_tpu_info().vmem_capacity_bytes)
    except Exception:  # noqa: BLE001 - any failure -> conservative default
        return 64 * _MIB


def _hw_budgets():
    cap = _vmem_capacity_bytes()
    if cap >= 96 * _MIB:
        # v5e / v6e: 128 MiB physical VMEM.  Fused-path live set is
        # ~4x block (double-buffered in + out) + 1x weights (Buffered(1)).
        return 24 * _MIB, 104 * _MIB
    # v7x (64 MiB per TC) or unknown: stay well under the physical limit.
    return 12 * _MIB, 56 * _MIB


# ----------------------------------------------------------------------------- kernels
def _se_fused_kernel(x_ref, w1_ref, b1_ref, w2_ref, b2_ref, o_ref, *, t_true):
    # x_ref: (Bb, C, T).  Lane-dense params: w1 (C,H), b1 (1,H), w2 (H,C), b2 (1,C).
    # Squeeze: f32 accumulation over the lane axis.  The block spans the full
    # (possibly non-multiple-of-128) T, so the logical extent is exact: no mask.
    m = jnp.sum(x_ref[...], axis=-1, dtype=jnp.float32) * (1.0 / t_true)  # (Bb, C)
    # Excite: batched, lane-dense row-vector MLP on the MXU.
    h = jnp.maximum(
        jnp.dot(m, w1_ref[...], preferred_element_type=jnp.float32) + b1_ref[...],
        0.0)                                                              # (Bb, H)
    s = jax.nn.sigmoid(
        jnp.dot(h, w2_ref[...], preferred_element_type=jnp.float32) + b2_ref[...])
    # Gate: re-index x_ref (don't reuse a bound full-slab value) and multiply in
    # the output dtype so no full-slab f32 temporary is materialized for bf16.
    s_x = s.astype(o_ref.dtype)                                           # (Bb, C)
    o_ref[...] = x_ref[...] * s_x[:, :, None]


def _se_reduce_excite_kernel(x_ref, w1_ref, b1_ref, w2_ref, b2_ref, s_ref,
                             acc_ref, *, t_true, t_tile, ragged):
    # Pass A of the two-pass path: T-tiled sum-reduce, excite at the last T step.
    kt = pl.program_id(1)

    @pl.when(kt == 0)
    def _():
        acc_ref[...] = jnp.zeros_like(acc_ref)

    x = x_ref[...]                                                        # (1, C, tt)
    if ragged:
        # cdiv grid: the last T tile is partial; zero garbage lanes past the
        # true T before accumulating (the wrapper no longer pads T in HBM).
        lane = lax.broadcasted_iota(jnp.int32, x.shape, 2)
        x = jnp.where(lane < (t_true - kt * t_tile), x, 0.0)
    acc_ref[...] += jnp.sum(x, axis=-1, dtype=jnp.float32)                # (1, C)

    @pl.when(kt == pl.num_programs(1) - 1)
    def _():
        m = acc_ref[...] * (1.0 / t_true)                                 # (1, C)
        h = jnp.maximum(
            jnp.dot(m, w1_ref[...], preferred_element_type=jnp.float32) + b1_ref[...],
            0.0)
        s = jax.nn.sigmoid(
            jnp.dot(h, w2_ref[...], preferred_element_type=jnp.float32) + b2_ref[...])
        # Emit scales shaped (1, C, 1): the lane->sublane relayout happens once
        # per batch here, keeping the hot gating pass a pure load-mul-store.
        s_ref[...] = jnp.transpose(s[None, :, :], (0, 2, 1))              # (1, C, 1)


def _se_gate_kernel(x_ref, s_ref, o_ref):
    # Pass B: fully parallel T-tiled gating.  Single fused mul + store; the
    # garbage tail of a partial last tile is never written back by Pallas.
    scale = s_ref[...].astype(o_ref.dtype)                                # (1, C, 1)
    o_ref[...] = x_ref[...] * scale


# ----------------------------------------------------------------------------- helpers
def _largest_divisor_leq(n, cap):
    cap = max(1, min(n, cap))
    for d in range(cap, 0, -1):
        if n % d == 0:
            return d
    return 1


def _pick_t_tile(t, budget_bytes, row_bytes):
    # Largest multiple-of-128 lane tile that fits the per-block budget; a cdiv
    # grid + in-kernel masking removes any divisibility requirement on T.
    tt = max(_LANE, (budget_bytes // max(row_bytes, 1)) // _LANE * _LANE)
    t_ceil = (t + _LANE - 1) // _LANE * _LANE
    return min(tt, t_ceil)


def _param_bytes(c, h, dtype):
    return (c * h + h + h * c + c) * jnp.dtype(dtype).itemsize


# ----------------------------------------------------------------------------- paths
def _se_fused(x, w1t, b1r, w2t, b2r, *, block_budget_bytes, vmem_limit_bytes):
    B, C, T = x.shape
    H = w1t.shape[1]
    itemsize = jnp.dtype(x.dtype).itemsize

    # Largest batch block that fits the per-block VMEM budget.
    max_bb = max(1, block_budget_bytes // (C * T * itemsize))
    bb = _largest_divisor_leq(B, max_bb)
    # For non-toy sizes keep >= 2 parallel grid steps so both v7x TensorCores
    # get work; tiny slabs stay on a single step (per-step overhead dominates).
    if B // bb < 2 and B >= 2 and bb * C * T * itemsize > (1 << 20):
        bb = _largest_divisor_leq(B, max(1, B // 2))
    grid = (B // bb,)

    kernel = functools.partial(_se_fused_kernel, t_true=T)
    weights_once = pl.Buffered(1)   # grid-invariant params: single-buffer them
    grid_spec = pltpu.PrefetchScalarGridSpec(
        num_scalar_prefetch=0,
        grid=grid,
        in_specs=[
            pl.BlockSpec((bb, C, T), lambda i: (i, 0, 0)),
            pl.BlockSpec((C, H), lambda i: (0, 0), pipeline_mode=weights_once),
            pl.BlockSpec((1, H), lambda i: (0, 0), pipeline_mode=weights_once),
            pl.BlockSpec((H, C), lambda i: (0, 0), pipeline_mode=weights_once),
            pl.BlockSpec((1, C), lambda i: (0, 0), pipeline_mode=weights_once),
        ],
        out_specs=pl.BlockSpec((bb, C, T), lambda i: (i, 0, 0)),
    )
    cost = pl.CostEstimate(
        flops=int(4 * B * C * H + 2 * B * C * T),
        transcendentals=int(B * C),
        bytes_accessed=int(2 * B * C * T * itemsize + _param_bytes(C, H, w1t.dtype)))
    return pl.pallas_call(
        kernel,
        out_shape=jax.ShapeDtypeStruct((B, C, T), x.dtype),
        grid_spec=grid_spec,
        cost_estimate=cost,
        compiler_params=pltpu.CompilerParams(
            dimension_semantics=("parallel",),
            vmem_limit_bytes=vmem_limit_bytes),
    )(x, w1t, b1r, w2t, b2r)


def _se_two_pass(x, w1t, b1r, w2t, b2r, *, block_budget_bytes, vmem_limit_bytes):
    B, C, T = x.shape
    H = w1t.shape[1]
    itemsize = jnp.dtype(x.dtype).itemsize
    tt = _pick_t_tile(T, block_budget_bytes, C * itemsize)
    n_t = (T + tt - 1) // tt
    ragged = (T % tt) != 0
    weights_once = pl.Buffered(1)
    pbytes = _param_bytes(C, H, w1t.dtype)

    # Pass A: T-tiled mean-reduce + lane-dense excite -> (B, C, 1) scales.
    reduce_kernel = functools.partial(
        _se_reduce_excite_kernel, t_true=T, t_tile=tt, ragged=ragged)
    cost_a = pl.CostEstimate(
        flops=int(B * C * T + 4 * B * C * H),
        transcendentals=int(B * C),
        bytes_accessed=int(B * C * T * itemsize + B * C * 4 + pbytes))
    scales = pl.pallas_call(
        reduce_kernel,
        out_shape=jax.ShapeDtypeStruct((B, C, 1), jnp.float32),
        grid_spec=pltpu.PrefetchScalarGridSpec(
            num_scalar_prefetch=0,
            grid=(B, n_t),
            in_specs=[
                pl.BlockSpec((1, C, tt), lambda b, t: (b, 0, t)),
                pl.BlockSpec((C, H), lambda b, t: (0, 0), pipeline_mode=weights_once),
                pl.BlockSpec((1, H), lambda b, t: (0, 0), pipeline_mode=weights_once),
                pl.BlockSpec((H, C), lambda b, t: (0, 0), pipeline_mode=weights_once),
                pl.BlockSpec((1, C), lambda b, t: (0, 0), pipeline_mode=weights_once),
            ],
            out_specs=pl.BlockSpec((1, C, 1), lambda b, t: (b, 0, 0)),
            scratch_shapes=[pltpu.VMEM((1, C), jnp.float32)],
        ),
        cost_estimate=cost_a,
        compiler_params=pltpu.CompilerParams(
            dimension_semantics=("parallel", "arbitrary"),
            vmem_limit_bytes=vmem_limit_bytes),
    )(x, w1t, b1r, w2t, b2r)

    # Pass B: fully parallel T-tiled gating (both TCs busy even for B == 1).
    cost_b = pl.CostEstimate(
        flops=int(B * C * T),
        transcendentals=0,
        bytes_accessed=int(2 * B * C * T * itemsize + B * C * 4))
    return pl.pallas_call(
        _se_gate_kernel,
        out_shape=jax.ShapeDtypeStruct((B, C, T), x.dtype),
        grid_spec=pltpu.PrefetchScalarGridSpec(
            num_scalar_prefetch=0,
            grid=(B, n_t),
            in_specs=[
                pl.BlockSpec((1, C, tt), lambda b, t: (b, 0, t)),
                pl.BlockSpec((1, C, 1), lambda b, t: (b, 0, 0)),
            ],
            out_specs=pl.BlockSpec((1, C, tt), lambda b, t: (b, 0, t)),
        ),
        cost_estimate=cost_b,
        compiler_params=pltpu.CompilerParams(
            dimension_semantics=("parallel", "parallel"),
            vmem_limit_bytes=vmem_limit_bytes),
    )(x, scales)


# ----------------------------------------------------------------------------- wrapper
def squeeze_excitation(x, w1, b1, w2, b2, *, block_budget_bytes=None):
    """SE forward.  x: (B, C, T).  Params in PyTorch nn.Linear layout:
    w1: (H, C), b1: (H,), w2: (C, H), b2: (C,) with H = C // reduction."""
    B, C, T = x.shape
    H = w1.shape[0]
    itemsize = jnp.dtype(x.dtype).itemsize

    budget, vmem_limit = _hw_budgets()
    if block_budget_bytes is not None:
        budget = block_budget_bytes

    # Lane-dense parameter layout for the row-vector excite MLP.
    w1t = jnp.asarray(w1).T                  # (C, H)
    w2t = jnp.asarray(w2).T                  # (H, C)
    b1r = jnp.asarray(b1).reshape(1, H)
    b2r = jnp.asarray(b2).reshape(1, C)

    # Ragged T is handled in-kernel; no wrapper-level jnp.pad / slice (each of
    # those would cost a full extra HBM read+write of the whole tensor).
    if C * T * itemsize <= budget:
        return _se_fused(x, w1t, b1r, w2t, b2r,
                         block_budget_bytes=budget, vmem_limit_bytes=vmem_limit)
    return _se_two_pass(x, w1t, b1r, w2t, b2r,
                        block_budget_bytes=budget, vmem_limit_bytes=vmem_limit)


# ----------------------------------------------------------------------------- reference
def se_reference(x, w1, b1, w2, b2):
    m = jnp.mean(x.astype(jnp.float32), axis=-1)          # (B, C)
    h = jax.nn.relu(m @ w1.T + b1)                         # (B, H)
    s = jax.nn.sigmoid(h @ w2.T + b2)                      # (B, C)
    return (x * s[:, :, None]).astype(x.dtype)


# ----------------------------------------------------------------------------- main
if __name__ == "__main__":
    B, C, T = 2, 16, 128
    reduction = 4
    H = C // reduction

    key = jax.random.PRNGKey(0)
    kx, k1, k2, k3, k4 = jax.random.split(key, 5)

    x = jax.random.normal(kx, (B, C, T), dtype=jnp.float32)

    bound1 = 1.0 / jnp.sqrt(C)
    w1 = jax.random.uniform(k1, (H, C), jnp.float32, -bound1, bound1)
    b1 = jax.random.uniform(k2, (H,), jnp.float32, -bound1, bound1)
    bound2 = 1.0 / jnp.sqrt(H)
    w2 = jax.random.uniform(k3, (C, H), jnp.float32, -bound2, bound2)
    b2 = jax.random.uniform(k4, (C,), jnp.float32, -bound2, bound2)

    # 1) Fused single-slab path.
    out = jax.block_until_ready(squeeze_excitation(x, w1, b1, w2, b2))
    ref = se_reference(x, w1, b1, w2, b2)
    assert out.shape == x.shape and out.dtype == x.dtype
    assert jnp.allclose(out, ref, atol=1e-5, rtol=1e-5), "fused path mismatch"

    # 2) Fused path with ragged T (masked tail handled in-kernel, no pad/slice).
    T2 = 200
    x2 = jax.random.normal(kx, (B, C, T2), dtype=jnp.float32)
    out2 = jax.block_until_ready(squeeze_excitation(x2, w1, b1, w2, b2))
    assert out2.shape == x2.shape
    assert jnp.allclose(out2, se_reference(x2, w1, b1, w2, b2),
                        atol=1e-5, rtol=1e-5), "ragged fused mismatch"

    # 3) Two-pass T-tiled path (forced via a tiny block budget), exact tiles.
    T3 = 512
    x3 = jax.random.normal(kx, (B, C, T3), dtype=jnp.float32)
    out3 = jax.block_until_ready(
        squeeze_excitation(x3, w1, b1, w2, b2, block_budget_bytes=C * 128 * 4))
    assert jnp.allclose(out3, se_reference(x3, w1, b1, w2, b2),
                        atol=1e-5, rtol=1e-5), "two-pass mismatch"

    # 4) Two-pass path with ragged T (partial last tile masked in the reduce).
    T4 = 500
    x4 = jax.random.normal(kx, (B, C, T4), dtype=jnp.float32)
    out4 = jax.block_until_ready(
        squeeze_excitation(x4, w1, b1, w2, b2, block_budget_bytes=C * 128 * 4))
    assert jnp.allclose(out4, se_reference(x4, w1, b1, w2, b2),
                        atol=1e-5, rtol=1e-5), "ragged two-pass mismatch"

    print("KERNEL_OK")
</pallas_src>

<mosaic_0001>
module attributes {stable_mosaic.version = 11 : i64} {
  func.func @_se_fused_kernel(%arg0: i32, %arg1: memref<2x16x128xf32, #tpu.memory_space<vmem>>, %arg2: memref<16x4xf32, #tpu.memory_space<vmem>>, %arg3: memref<1x4xf32, #tpu.memory_space<vmem>>, %arg4: memref<4x16xf32, #tpu.memory_space<vmem>>, %arg5: memref<1x16xf32, #tpu.memory_space<vmem>>, %arg6: memref<2x16x128xf32, #tpu.memory_space<vmem>>) attributes {dimension_semantics = [#tpu.dimension_semantics<parallel>], iteration_bounds = array<i64: 1>, scalar_prefetch = 0 : i64, scratch_operands = 0 : i64, tpu.core_type = #tpu.core_type<tc>, window_params = [{transform_indices = @transform_0, window_bounds = array<i64: 2, 16, 128>}, {pipeline_mode = #tpu.pipeline_mode<synchronous>, transform_indices = @transform_1, window_bounds = array<i64: 16, 4>}, {pipeline_mode = #tpu.pipeline_mode<synchronous>, transform_indices = @transform_2, window_bounds = array<i64: 1, 4>}, {pipeline_mode = #tpu.pipeline_mode<synchronous>, transform_indices = @transform_3, window_bounds = array<i64: 4, 16>}, {pipeline_mode = #tpu.pipeline_mode<synchronous>, transform_indices = @transform_4, window_bounds = array<i64: 1, 16>}, {transform_indices = @transform_5, window_bounds = array<i64: 2, 16, 128>}]} {
    %c0 = arith.constant 0 : index
    %c0_0 = arith.constant 0 : index
    %c0_1 = arith.constant 0 : index
    %0 = vector.load %arg1[%c0, %c0_0, %c0_1] : memref<2x16x128xf32, #tpu.memory_space<vmem>>, vector<2x16x128xf32>
    %cst = arith.constant dense<0.000000e+00> : vector<2x16xf32>
    %1 = vector.multi_reduction <add>, %0, %cst [2] : vector<2x16x128xf32> to vector<2x16xf32>
    %cst_2 = arith.constant 7.812500e-03 : f32
    %2 = vector.broadcast %cst_2 : f32 to vector<2x16xf32>
    %3 = arith.mulf %1, %2 : vector<2x16xf32>
    %c0_3 = arith.constant 0 : index
    %c0_4 = arith.constant 0 : index
    %4 = vector.load %arg2[%c0_3, %c0_4] : memref<16x4xf32, #tpu.memory_space<vmem>>, vector<16x4xf32>
    %cst_5 = arith.constant dense<0.000000e+00> : vector<2x4xf32>
    %5 = tpu.matmul %3, %4, %cst_5 {dimension_numbers = #tpu.dot_dimension_numbers<[1], [0], [0], [1], [0, 0, 1, 1], [], []>} : vector<2x16xf32>, vector<16x4xf32>, vector<2x4xf32> -> vector<2x4xf32>
    %c0_6 = arith.constant 0 : index
    %c0_7 = arith.constant 0 : index
    %6 = vector.load %arg3[%c0_6, %c0_7] : memref<1x4xf32, #tpu.memory_space<vmem>>, vector<1x4xf32>
    %7 = vector.broadcast %6 : vector<1x4xf32> to vector<2x4xf32>
    %8 = arith.addf %5, %7 : vector<2x4xf32>
    %cst_8 = arith.constant 0.000000e+00 : f32
    %9 = vector.broadcast %cst_8 : f32 to vector<2x4xf32>
    %10 = arith.maximumf %8, %9 : vector<2x4xf32>
    %c0_9 = arith.constant 0 : index
    %c0_10 = arith.constant 0 : index
    %11 = vector.load %arg4[%c0_9, %c0_10] : memref<4x16xf32, #tpu.memory_space<vmem>>, vector<4x16xf32>
    %cst_11 = arith.constant dense<0.000000e+00> : vector<2x16xf32>
    %12 = tpu.matmul %10, %11, %cst_11 {dimension_numbers = #tpu.dot_dimension_numbers<[1], [0], [0], [1], [0, 0, 1, 1], [], []>} : vector<2x4xf32>, vector<4x16xf32>, vector<2x16xf32> -> vector<2x16xf32>
    %c0_12 = arith.constant 0 : index
    %c0_13 = arith.constant 0 : index
    %13 = vector.load %arg5[%c0_12, %c0_13] : memref<1x16xf32, #tpu.memory_space<vmem>>, vector<1x16xf32>
    %14 = vector.broadcast %13 : vector<1x16xf32> to vector<2x16xf32>
    %15 = arith.addf %12, %14 : vector<2x16xf32>
    %16 = arith.negf %15 : vector<2x16xf32>
    %17 = math.exp %16 : vector<2x16xf32>
    %cst_14 = arith.constant 1.000000e+00 : f32
    %18 = vector.broadcast %cst_14 : f32 to vector<2x16xf32>
    %19 = arith.addf %18, %17 : vector<2x16xf32>
    %20 = arith.divf %18, %19 : vector<2x16xf32>
    %c0_15 = arith.constant 0 : index
    %c0_16 = arith.constant 0 : index
    %c0_17 = arith.constant 0 : index
    %21 = vector.load %arg1[%c0_15, %c0_16, %c0_17] : memref<2x16x128xf32, #tpu.memory_space<vmem>>, vector<2x16x128xf32>
    %22 = vector.shape_cast %20 : vector<2x16xf32> to vector<2x16x1xf32>
    %23 = vector.broadcast %22 : vector<2x16x1xf32> to vector<2x16x128xf32>
    %24 = arith.mulf %21, %23 : vector<2x16x128xf32>
    %c0_18 = arith.constant 0 : index
    %c0_19 = arith.constant 0 : index
    %c0_20 = arith.constant 0 : index
    %25 = vector.load %arg6[%c0_18, %c0_19, %c0_20] : memref<2x16x128xf32, #tpu.memory_space<vmem>>, vector<2x16x128xf32>
    tpu.vector_store %arg6[%c0_18, %c0_19, %c0_20], %24 {strides = array<i32>} : memref<2x16x128xf32, #tpu.memory_space<vmem>>, vector<2x16x128xf32>,
    return
  }
  func.func @transform_0(%arg0: i32) -> (i32, i32, i32) {
    %c0_i32 = arith.constant 0 : i32
    %c0_i32_0 = arith.constant 0 : i32
    %c0_i32_1 = arith.constant 0 : i32
    return %arg0, %c0_i32, %c0_i32_0 : i32, i32, i32
  }
  func.func @transform_1(%arg0: i32) -> (i32, i32) {
    %c0_i32 = arith.constant 0 : i32
    %c0_i32_0 = arith.constant 0 : i32
    %c0_i32_1 = arith.constant 0 : i32
    return %c0_i32, %c0_i32_0 : i32, i32
  }
  func.func @transform_2(%arg0: i32) -> (i32, i32) {
    %c0_i32 = arith.constant 0 : i32
    %c0_i32_0 = arith.constant 0 : i32
    %c0_i32_1 = arith.constant 0 : i32
    return %c0_i32, %c0_i32_0 : i32, i32
  }
  func.func @transform_3(%arg0: i32) -> (i32, i32) {
    %c0_i32 = arith.constant 0 : i32
    %c0_i32_0 = arith.constant 0 : i32
    %c0_i32_1 = arith.constant 0 : i32
    return %c0_i32, %c0_i32_0 : i32, i32
  }
  func.func @transform_4(%arg0: i32) -> (i32, i32) {
    %c0_i32 = arith.constant 0 : i32
    %c0_i32_0 = arith.constant 0 : i32
    %c0_i32_1 = arith.constant 0 : i32
    return %c0_i32, %c0_i32_0 : i32, i32
  }
  func.func @transform_5(%arg0: i32) -> (i32, i32, i32) {
    %c0_i32 = arith.constant 0 : i32
    %c0_i32_0 = arith.constant 0 : i32
    %c0_i32_1 = arith.constant 0 : i32
    return %arg0, %c0_i32, %c0_i32_0 : i32, i32, i32
  }
}

</mosaic_0001>

<llo_original>
// kernel: tpu_custom_call.1
$region0: #{tpu_custom_call.1}
  #allocation0 [shape = 'u32[]', space=smem, size = 0x4, offset = 0x4, fixed_abs, tag = 'smem constant byte address 0x4 - core index']
  #allocation1 [shape = 'u32[72,128]{1,0:T(1,128)}', space=vmem, size = 0x9000, scoped, tag = 'internal scratch']
  %s0 = inlined_call_operand.hbm [shape: f32[2,16,128], index: 0, kind: input, shape index: {}]
  %s1 = inlined_call_operand.vmem [shape: f32[16,4], index: 1, kind: input, shape index: {}]
  %s2 = inlined_call_operand.vmem [shape: f32[1,4], index: 2, kind: input, shape index: {}]
  %s3 = inlined_call_operand.vmem [shape: f32[4,16], index: 3, kind: input, shape index: {}]
  %s4 = inlined_call_operand.vmem [shape: f32[1,16], index: 4, kind: input, shape index: {}]
  %s5 = inlined_call_operand.hbm [shape: f32[2,16,128], index: 5, kind: output, shape index: {}]
  %s6 = sld [smem:[#allocation0]]
  $region34: #{tpu_custom_call.1} parent=0
    _
  %s8 = ssub.s32 1, %s6
  %s9 = scalar_select 0, %s8, %s6
  $region1: #{tpu_custom_call.1} parent=0
    #allocation2 [shape = 'u8[16384]{0}', space=vmem, size = 0x4000, scoped, tag = 'input window, operand 0, single buffered']
    #allocation3 [shape = 's32[1]{0}', space=sflag, size = 0x4, scoped, tag = 'scoped memory for tpu_custom_call.1']
    #allocation4 [shape = 's32[1]{0}', space=sflag, size = 0x4, scoped, tag = 'scoped memory for tpu_custom_call.1']
    #allocation5 [shape = 'u8[16384]{0}', space=vmem, size = 0x4000, scoped, tag = 'output window, operand 0, single buffered']
    %10 = vsyncpa [#allocation3], 0
    %11 = vsyncpa [#allocation4], 0
    // Predicated region
    $region2: #{tpu_custom_call.1} parent=1 // pred_check
      _
    $region3: #{tpu_custom_call.1} parent=1 // pred_check_branch
      %13 = sbr.rel (0) target = $region5
    $region4: #{tpu_custom_call.1} parent=1 // pred_region
      %15 = vsyncadd [#allocation3], 0
      %s16 = sshll.u32 %s0, 4
      %s17 = int_to_ptr.hbm [resolvable:$true] %s16
      %s18 = sshll.u32 [#allocation2], 4
      %s19 = int_to_ptr.vmem [resolvable:$true] %s18
      %24 = dma.hbm_to_vmem [thread:$0]  %s17, 512, %s19, [#allocation3], 128, 128, 8
    $region5: #{tpu_custom_call.1} parent=1 // pred_fallthru
      _
    // Predicated region
    $region6: #{tpu_custom_call.1} parent=1 // pred_check
      _
    $region7: #{tpu_custom_call.1} parent=1 // pred_check_branch
      %26 = sbr.rel (0) target = $region9
    $region8: #{tpu_custom_call.1} parent=1 // pred_region
      _
    $region9: #{tpu_custom_call.1} parent=1 // pred_fallthru
      _
    // Predicated region
    $region10: #{tpu_custom_call.1} parent=1 // pred_check
      _
    $region11: #{tpu_custom_call.1} parent=1 // pred_check_branch
      %28 = sbr.rel (0) target = $region13
    $region12: #{tpu_custom_call.1} parent=1 // pred_region
      _
    $region13: #{tpu_custom_call.1} parent=1 // pred_fallthru
      _
    // Predicated region
    $region14: #{tpu_custom_call.1} parent=1 // pred_check
      _
    $region15: #{tpu_custom_call.1} parent=1 // pred_check_branch
      %30 = sbr.rel (0) target = $region17
    $region16: #{tpu_custom_call.1} parent=1 // pred_region
      _
    $region17: #{tpu_custom_call.1} parent=1 // pred_fallthru
      _
    // Predicated region
    $region18: #{tpu_custom_call.1} parent=1 // pred_check
      _
    $region19: #{tpu_custom_call.1} parent=1 // pred_check_branch
      %32 = sbr.rel (0) target = $region21
    $region20: #{tpu_custom_call.1} parent=1 // pred_region
      _
    $region21: #{tpu_custom_call.1} parent=1 // pred_fallthru
      _
    // Predicated region
    $region22: #{tpu_custom_call.1} parent=1 // pred_check
      _
    $region23: #{tpu_custom_call.1} parent=1 // pred_check_branch
      %34 = sbr.rel (0) target = $region25
    $region24: #{tpu_custom_call.1} parent=1 // pred_region
      %36 = dma.done [#allocation3], 512
    $region25: #{tpu_custom_call.1} parent=1 // pred_fallthru
      _
    %v37 = vld [vmem:[#allocation2] sm:$0xff]
    %v38 = vld [vmem:[#allocation2 + $0x8] sm:$0xff]
    %v39 = vld [vmem:[#allocation2 + $0x10] sm:$0xff]
    %v40 = vld [vmem:[#allocation2 + $0x18] sm:$0xff]
    %41 = vadd.xlane.f32.xlu0 %v37
    %v42 = vpop.xlane.xlu0 %41
    %43 = vadd.xlane.f32.xlu0 %v38
    %v44 = vpop.xlane.xlu0 %43
    %45 = vadd.xlane.f32.xlu0 %v39
    %v46 = vpop.xlane.xlu0 %45
    %47 = vadd.xlane.f32.xlu0 %v40
    %v48 = vpop.xlane.xlu0 %47
    %v49 = vmul.f32 %v42, 0.0078125
    %v50 = vmul.f32 %v44, 0.0078125
    %v51 = vmul.f32 %v46, 0.0078125
    %v52 = vmul.f32 %v48, 0.0078125
    %v53 = vld [vmem:[%s1] sm:$0xff]
    %v54 = vld [vmem:[%s1 + $0x8] sm:$0xff]
    %v55 = vld [vmem:[%s2] sm:$0x1]
    %v57 = vperm.slane %v55, 0
    %v63 = vlaneseq
    %v64 = vand.u32 %v63, 127
    %v65 = vperm.slane %v49, %v64
    %v66 = vadd.s32 %v64, 4294967288
    %v67 = vperm.slane %v50, %v66
    %vm68 = vcmask 130112
    %v69 = vsel %vm68, %v67, %v65
    %v70 = vperm.slane %v51, %v64
    %v71 = vperm.slane %v52, %v66
    %v72 = vsel %vm68, %v71, %v70
    %vm73 = vcmask 1041409
    %v74 = vsel %vm73, %v72, %v69
    %vm75 = vcmask 130048
    %v76 = vsel %vm75, %v74, 0
    %78 = vmatpush.msra.mxu0 0.0
    %79 = vmatpush.msra.mxu0 0.0
    %80 = vmatpush.msra.mxu0 0.0
    %81 = vmatpush.msra.mxu0 0.0
    %82 = vmatpush.msra.mxu0 0.0
    %83 = vmatpush.msra.mxu0 0.0
    %84 = vmatpush.msra.mxu0 0.0
    %85 = vmatpush.msra.mxu0 0.0
    %86 = vmatpush.msra.mxu0 0.0
    %87 = vmatpush.msra.mxu0 0.0
    %88 = vmatpush.msra.mxu0 0.0
    %89 = vmatpush.msra.mxu0 0.0
    %90 = vmatpush.msra.mxu0 0.0
    %91 = vmatpush.msra.mxu0 0.0
    %92 = vmatpush.msra.mxu0 %v54
    %93 = vmatpush.msra.mxu0 %v53
    %94 = vmatmul.f32.gmra.mxu0 %v76
    %v95 = vpop.f32.mrf.mxu0
    %v96 = vadd.f32 %v57, %v95
    %97 = vdwg.mxu0
    %v98 = vmax.f32 %v96, 0.0
    %v99 = vld [vmem:[%s3] sm:$0xf]
    %v100 = vld [vmem:[%s4] sm:$0x1]
    %v102 = vperm.slane %v100, 0
    %vm104 = vcmask 31744
    %v106 = vsel %vm104, %v98, 0
    %vm108 = vcmask 1043456
    %v110 = vsel %vm108, %v99, 0
    %112 = vmatpush.msra.mxu0 0.0
    %113 = vmatpush.msra.mxu0 0.0
    %114 = vmatpush.msra.mxu0 0.0
    %115 = vmatpush.msra.mxu0 0.0
    %116 = vmatpush.msra.mxu0 0.0
    %117 = vmatpush.msra.mxu0 0.0
    %118 = vmatpush.msra.mxu0 0.0
    %119 = vmatpush.msra.mxu0 0.0
    %120 = vmatpush.msra.mxu0 0.0
    %121 = vmatpush.msra.mxu0 0.0
    %122 = vmatpush.msra.mxu0 0.0
    %123 = vmatpush.msra.mxu0 0.0
    %124 = vmatpush.msra.mxu0 0.0
    %125 = vmatpush.msra.mxu0 0.0
    %126 = vmatpush.msra.mxu0 0.0
    %127 = vmatpush.msra.mxu0 %v110
    %128 = vmatmul.f32.gmra.mxu0 %v106
    %v129 = vpop.f32.mrf.mxu0
    %v130 = vadd.f32 %v102, %v129
    %131 = vdwg.mxu0
    %v132 = vxor.u32 %v130, 2147483648
    %v133 = vmul.f32 %v132, 1.442695
    %v134 = vpow.pop %v133
    %v135 = vadd.f32 %v134, 1.0
    %v136 = vrcp.pop %v135
    %v137 = vmul.f32 %v135, %v136
    %v138 = vsub.f32 1.0, %v137
    %v139 = vmul.f32 %v136, %v138
    %v140 = vadd.f32 %v136, %v139
    %vm141 = vweird.f32 %v135
    %vm142 = vweird.f32 %v136
    %vm143 = vmor %vm141, %vm142
    %v144 = vsel %vm143, %v136, %v140
    %v145 = vand.u32 2147483647, %v135
    %vm146 = vcmp.eq.f32.partialorder %v145, 8.507059e+37
    %v147 = vand.u32 %v135, 2147483648
    %v148 = vor.u32 1.1754944e-38, %v147
    %v149 = vsel %vm146, %v148, %v144
    %v150 = vmul.f32 1.0, %v149
    %v151 = vperm.slane %v150, 0
    %v152 = vlaneseq
    %v153 = vshrl.u32 %v152, 7
    %155 = vset.pattern.permute.xlu0 %v153
    %156 = vperm.xlu0 %155, %v151
    %v157 = vpop.permute.xlu0 %156
    %v158 = vlaneseq
    %v159 = vshrl.u32 %v158, 7
    %v160 = vadd.s32 %v159, 8
    %161 = vset.pattern.permute.xlu0 %v160
    %162 = vperm.xlu0 %161, %v151
    %v163 = vpop.permute.xlu0 %162
    %v164 = vperm.slane %v150, 1
    %v165 = vlaneseq
    %v166 = vshrl.u32 %v165, 7
    %168 = vset.pattern.permute.xlu0 %v166
    %169 = vperm.xlu0 %168, %v164
    %v170 = vpop.permute.xlu0 %169
    %v171 = vlaneseq
    %v172 = vshrl.u32 %v171, 7
    %v173 = vadd.s32 %v172, 8
    %174 = vset.pattern.permute.xlu0 %v173
    %175 = vperm.xlu0 %174, %v164
    %v176 = vpop.permute.xlu0 %175
    %v177 = vmul.f32 %v37, %v157
    %v178 = vmul.f32 %v38, %v163
    %v179 = vmul.f32 %v39, %v170
    %v180 = vmul.f32 %v40, %v176
    %181 = vst [vmem:[#allocation5] sm:$0xff] %v177
    %182 = vst [vmem:[#allocation5 + $0x8] sm:$0xff] %v178
    %183 = vst [vmem:[#allocation5 + $0x10] sm:$0xff] %v179
    %184 = vst [vmem:[#allocation5 + $0x18] sm:$0xff] %v180
    // Predicated region
    $region26: #{tpu_custom_call.1} parent=1 // pred_check
      _
    $region27: #{tpu_custom_call.1} parent=1 // pred_check_branch
      %186 = sbr.rel (0) target = $region29
    $region28: #{tpu_custom_call.1} parent=1 // pred_region
      %188 = vsyncadd [#allocation4], 0
      %s189 = sshll.u32 [#allocation5], 4
      %s190 = int_to_ptr.vmem [resolvable:$true] %s189
      %s191 = sshll.u32 %s5, 4
      %s192 = int_to_ptr.hbm [resolvable:$true] %s191
      %197 = dma.vmem_to_hbm [thread:$0]  %s190, 512, %s192, [#allocation4], 128, 128, 8
    $region29: #{tpu_custom_call.1} parent=1 // pred_fallthru
      _
    // Predicated region
    $region30: #{tpu_custom_call.1} parent=1 // pred_check
      _
    $region31: #{tpu_custom_call.1} parent=1 // pred_check_branch
      %199 = sbr.rel (0) target = $region33
    $region32: #{tpu_custom_call.1} parent=1 // pred_region
      %201 = dma.done [#allocation4], 512
    $region33: #{tpu_custom_call.1} parent=1 // pred_fallthru
      _
    %202 = vsyncpa [#allocation3], 1
    %203 = vsyncpa [#allocation4], 1

</llo_original>
